<compile_context>
chip_gen: v6e
topology: v6e:2x2x1
jax: 0.10.0
libtpu: 0.0.40
codegen_flags: <defaults>
</compile_context>

<pallas_src>
import functools

import numpy as np
import jax
import jax.numpy as jnp
from jax.experimental import pallas as pl
from jax.experimental.pallas import tpu as pltpu


# ----------------------------------------------------------------------------- weights


def _gaussian_taps_1d(radius: int, sigma: float) -> np.ndarray:
    """1-D factor g of the scipy.ndimage.gaussian_filter(delta, mode='reflect') kernel."""
    lw = int(4.0 * sigma + 0.5)
    t = np.arange(-lw, lw + 1, dtype=np.float64)
    k1 = np.exp(-0.5 * (t / sigma) ** 2)
    k1 /= k1.sum()
    delta = np.zeros((radius,), dtype=np.float64)
    delta[(radius - 1) // 2] = 1.0
    dpad = np.pad(delta, (lw, lw), mode="symmetric")  # scipy ndimage 'reflect'
    return np.array([np.dot(k1, dpad[i:i + 2 * lw + 1]) for i in range(radius)])


def _gaussian_kernel_2d(radius: int, sigma: float) -> np.ndarray:
    """Replicates scipy.ndimage.gaussian_filter applied to a centered delta of shape
    (radius, radius) with mode='reflect' (numpy 'symmetric'). Used for the rank-1 guard
    and the pure-JAX reference."""
    lw = int(4.0 * sigma + 0.5)
    t = np.arange(-lw, lw + 1, dtype=np.float64)
    k1 = np.exp(-0.5 * (t / sigma) ** 2)
    k1 /= k1.sum()

    n = np.zeros((radius, radius), dtype=np.float64)
    c = (radius - 1) // 2
    n[c, c] = 1.0

    def corr1d(a, axis):
        pad = [(0, 0), (0, 0)]
        pad[axis] = (lw, lw)
        ap = np.pad(a, pad, mode="symmetric")
        out = np.zeros_like(a)
        for i in range(2 * lw + 1):
            sl = [slice(None), slice(None)]
            sl[axis] = slice(i, i + a.shape[axis])
            out = out + k1[i] * ap[tuple(sl)]
        return out

    return corr1d(corr1d(n, 0), 1).astype(np.float32)


def _reflect_band_matrix(size: int, g: np.ndarray) -> np.ndarray:
    """Banded (size, size) matrix M with reflection folded in: out[o] = sum_j in[j] * M[j, o]
    equals the 'valid' correlation of the reflection-padded input with the 1-D taps g."""
    radius = len(g)
    p = (radius - 1) // 2
    m = np.zeros((size, size), dtype=np.float64)
    for o in range(size):
        for v in range(radius):
            j = o - p + v
            if j < 0:
                j = -j
            elif j >= size:
                j = 2 * (size - 1) - j
            m[j, o] += g[v]
    return m.astype(np.float32)


# ----------------------------------------------------------------------------- sizing helpers


def _round_up(x: int, m: int) -> int:
    return ((x + m - 1) // m) * m


def _plane_vmem_bytes(h, w, hs, itemsize):
    """Per-plane per-step VMEM footprint estimate."""
    return (2 * h * w * itemsize      # input block (double-buffered)
            + 2 * h * w * itemsize    # output block (double-buffered)
            + hs * w * 4              # f32 row-reflected scratch
            + 4 * h * w * 4)          # f32 working values (x, yv, matmul result, cast)


def _choose_planes_per_block(nc, h, w, hs, itemsize, budget_bytes=20 << 20):
    """Largest divisor of nc fitting the VMEM budget, capped at nc//2 so the grid has at
    least two steps (lets dimension_semantics=('parallel',) shard across v7x's 2 TCs)."""
    per_plane = _plane_vmem_bytes(h, w, hs, itemsize)
    fixed = 2 * w * w * 4             # resident (W, W) band matrix, double-buffered
    avail = max(budget_bytes - fixed, per_plane)
    tb = int(max(1, min(nc, avail // per_plane)))
    if nc >= 2:
        tb = min(tb, nc // 2)
    while nc % tb:
        tb -= 1
    return tb


# ----------------------------------------------------------------------------- kernel


def _gauss_sep_kernel(x_ref, mh_ref, o_ref, xp_ref, *, taps, pad, base):
    """One grid step: TB image planes.
       x_ref : (TB, H, W)           unpadded input planes
       mh_ref: (W, W) f32           banded column matrix (taps + column reflection)
       o_ref : (TB, H, W)           output planes
       xp_ref: (TB, Hs, W) f32      scratch; rows [base, base+H) hold x (sublane-aligned
                                    bulk store), reflected rows sit just outside that range.
    """
    TB, H, W = x_ref.shape
    R = len(taps)

    x = x_ref[...].astype(jnp.float32)                     # load + cast exactly once

    # --- fused reflection padding of rows (VMEM only, never materialized in HBM) ---
    xp_ref[:, base:base + H, :] = x                        # sublane-aligned bulk store
    for q in range(pad):
        # top:    padded row (base - pad + q)  <- x row (pad - q)
        xp_ref[:, base - pad + q:base - pad + q + 1, :] = x[:, pad - q:pad - q + 1, :]
        # bottom: padded row (base + H + q)    <- x row (H - 2 - q)
        xp_ref[:, base + H + q:base + H + q + 1, :] = x[:, H - 2 - q:H - 1 - q, :]

    # --- vertical pass: R cheap sublane-offset taps, weights baked as constants (VPU) ---
    lo = base - pad
    yv = taps[0] * xp_ref[:, lo:lo + H, :]
    for u in range(1, R):
        yv = yv + taps[u] * xp_ref[:, lo + u:lo + u + H, :]   # (TB, H, W) f32

    # --- horizontal pass: a single (TB*H, W) x (W, W) matmul on the MXU ---------------
    # Leading-dim collapse is layout-preserving; one matmul fills the MXU rows instead of
    # TB tiny batched matmuls, and the (W, W) matrix is never broadcast/copied.
    out = jnp.dot(yv.reshape(TB * H, W), mh_ref[...],
                  preferred_element_type=jnp.float32)
    o_ref[...] = out.reshape(TB, H, W).astype(o_ref.dtype)


# ----------------------------------------------------------------------------- wrapper


def gaussian_layer(x: jax.Array, radius: int, sigma: float) -> jax.Array:
    """Forward pass of GaussianLayer: ReflectionPad2d((radius-1)//2) followed by a
    depthwise (groups=3) radius x radius Gaussian convolution, no bias."""
    assert radius % 2 > 0, "Radius can not be even!"
    assert sigma > 0, "Sigma should be non-negative!"
    N, C, H, W = x.shape
    assert C == 3, "GaussianLayer is defined for 3 channels"
    pad = (radius - 1) // 2
    assert H > pad and W > pad, "Reflection padding requires pad < spatial size"

    g = _gaussian_taps_1d(radius, sigma)                   # (R,)
    k2d = _gaussian_kernel_2d(radius, sigma)               # (R, R)
    # Rank-1 guard: the scipy-equivalent 2-D kernel must factor as outer(g, g).
    assert np.allclose(np.outer(g, g), k2d, rtol=1e-5, atol=1e-8), \
        "Gaussian kernel is not separable anymore; update the Pallas kernel."

    taps = tuple(float(v) for v in g)                      # baked as Python constants
    # TODO(synk): for very large W, replace the dense (W, W) band matrix (W^2*4 B VMEM and
    # O(H*W^2) MXU flops) with a W-tiled block-band matmul or R lane-shifted pltpu.roll taps.
    mh = jnp.asarray(_reflect_band_matrix(W, g), dtype=jnp.float32)

    NC = N * C
    xr = x.reshape(NC, H, W)

    base = _round_up(pad, 8) if pad > 0 else 0             # sublane-aligned bulk-store offset
    Hs = _round_up(base + H + pad, 8)                      # scratch rows
    TB = _choose_planes_per_block(NC, H, W, Hs, x.dtype.itemsize)

    est = 2 * W * W * 4 + TB * _plane_vmem_bytes(H, W, Hs, x.dtype.itemsize)
    vmem_limit = int(min(96 << 20, max(32 << 20, 2 * est)))

    # TODO(synk): for very large planes (per-plane f32 working set approaching ~16-24 MiB,
    # esp. v7x's 64 MiB VMEM) add a row-tiled grid axis with a 2*pad halo instead of
    # whole-plane blocks, and try pipeline_mode=pl.Buffered(3) on the input spec.
    out = pl.pallas_call(
        functools.partial(_gauss_sep_kernel, taps=taps, pad=pad, base=base),
        out_shape=jax.ShapeDtypeStruct((NC, H, W), x.dtype),
        grid=(NC // TB,),
        in_specs=[
            pl.BlockSpec((TB, H, W), lambda i: (i, 0, 0)),   # TB unpadded planes per step
            pl.BlockSpec((W, W), lambda i: (0, 0)),          # banded column matrix (resident)
        ],
        out_specs=pl.BlockSpec((TB, H, W), lambda i: (i, 0, 0)),  # contiguous writeback DMA
        scratch_shapes=[pltpu.VMEM((TB, Hs, W), jnp.float32)],
        compiler_params=pltpu.CompilerParams(
            dimension_semantics=("parallel",),
            vmem_limit_bytes=vmem_limit,
        ),
    )(xr, mh)

    return out.reshape(N, C, H, W)


# ----------------------------------------------------------------------------- reference


def _reference(x, radius, sigma):
    """Pure-JAX reference (depthwise conv via lax.conv_general_dilated on the 2-D kernel)."""
    p = (radius - 1) // 2
    k2d = jnp.asarray(_gaussian_kernel_2d(radius, sigma), dtype=jnp.float32)
    xp = jnp.pad(x, ((0, 0), (0, 0), (p, p), (p, p)), mode="reflect")
    w = jnp.tile(k2d[None, None], (3, 1, 1, 1))  # (out=3, in/groups=1, R, R)
    return jax.lax.conv_general_dilated(
        xp, w, window_strides=(1, 1), padding="VALID",
        dimension_numbers=("NCHW", "OIHW", "NCHW"), feature_group_count=3)


if __name__ == "__main__":
    radius, sigma = 5, 1.0
    key = jax.random.PRNGKey(0)
    x = jax.random.normal(key, (2, 3, 16, 16), dtype=jnp.float32)

    y = jax.block_until_ready(gaussian_layer(x, radius, sigma))
    y_ref = jax.block_until_ready(_reference(x, radius, sigma))

    assert y.shape == (2, 3, 16, 16)
    assert jnp.allclose(y, y_ref, atol=1e-5, rtol=1e-5), float(jnp.max(jnp.abs(y - y_ref)))

    print("KERNEL_OK")
</pallas_src>

<mosaic_0001>
module attributes {stable_mosaic.version = 11 : i64} {
  func.func @_gauss_sep_kernel(%arg0: i32, %arg1: memref<3x16x16xf32, #tpu.memory_space<vmem>>, %arg2: memref<16x16xf32, #tpu.memory_space<vmem>>, %arg3: memref<3x16x16xf32, #tpu.memory_space<vmem>>, %arg4: memref<3x32x16xf32, #tpu.memory_space<vmem>>) attributes {dimension_semantics = [#tpu.dimension_semantics<parallel>], iteration_bounds = array<i64: 2>, scalar_prefetch = 0 : i64, scratch_operands = 1 : i64, tpu.core_type = #tpu.core_type<tc>, window_params = [{transform_indices = @transform_0, window_bounds = array<i64: 3, 16, 16>}, {pipeline_mode = #tpu.pipeline_mode<synchronous>, transform_indices = @transform_1, window_bounds = array<i64: 16, 16>}, {transform_indices = @transform_2, window_bounds = array<i64: 3, 16, 16>}]} {
    %c0 = arith.constant 0 : index
    %c0_0 = arith.constant 0 : index
    %c0_1 = arith.constant 0 : index
    %0 = vector.load %arg1[%c0, %c0_0, %c0_1] : memref<3x16x16xf32, #tpu.memory_space<vmem>>, vector<3x16x16xf32>
    %c0_2 = arith.constant 0 : index
    %c8 = arith.constant 8 : index
    %c0_3 = arith.constant 0 : index
    %1 = vector.load %arg4[%c0_2, %c8, %c0_3] : memref<3x32x16xf32, #tpu.memory_space<vmem>>, vector<3x16x16xf32>
    tpu.vector_store %arg4[%c0_2, %c8, %c0_3], %0 {strides = array<i32>} : memref<3x32x16xf32, #tpu.memory_space<vmem>>, vector<3x16x16xf32>,
    %2 = vector.extract_strided_slice %0 {offsets = [0, 2, 0], sizes = [3, 1, 16], strides = [1, 1, 1]} : vector<3x16x16xf32> to vector<3x1x16xf32>
    %c0_4 = arith.constant 0 : index
    %c6 = arith.constant 6 : index
    %c0_5 = arith.constant 0 : index
    %3 = vector.load %arg4[%c0_4, %c6, %c0_5] : memref<3x32x16xf32, #tpu.memory_space<vmem>>, vector<3x1x16xf32>
    tpu.vector_store %arg4[%c0_4, %c6, %c0_5], %2 {strides = array<i32>} : memref<3x32x16xf32, #tpu.memory_space<vmem>>, vector<3x1x16xf32>,
    %4 = vector.extract_strided_slice %0 {offsets = [0, 14, 0], sizes = [3, 1, 16], strides = [1, 1, 1]} : vector<3x16x16xf32> to vector<3x1x16xf32>
    %c0_6 = arith.constant 0 : index
    %c24 = arith.constant 24 : index
    %c0_7 = arith.constant 0 : index
    %5 = vector.load %arg4[%c0_6, %c24, %c0_7] : memref<3x32x16xf32, #tpu.memory_space<vmem>>, vector<3x1x16xf32>
    tpu.vector_store %arg4[%c0_6, %c24, %c0_7], %4 {strides = array<i32>} : memref<3x32x16xf32, #tpu.memory_space<vmem>>, vector<3x1x16xf32>,
    %6 = vector.extract_strided_slice %0 {offsets = [0, 1, 0], sizes = [3, 1, 16], strides = [1, 1, 1]} : vector<3x16x16xf32> to vector<3x1x16xf32>
    %c0_8 = arith.constant 0 : index
    %c7 = arith.constant 7 : index
    %c0_9 = arith.constant 0 : index
    %7 = vector.load %arg4[%c0_8, %c7, %c0_9] : memref<3x32x16xf32, #tpu.memory_space<vmem>>, vector<3x1x16xf32>
    tpu.vector_store %arg4[%c0_8, %c7, %c0_9], %6 {strides = array<i32>} : memref<3x32x16xf32, #tpu.memory_space<vmem>>, vector<3x1x16xf32>,
    %8 = vector.extract_strided_slice %0 {offsets = [0, 13, 0], sizes = [3, 1, 16], strides = [1, 1, 1]} : vector<3x16x16xf32> to vector<3x1x16xf32>
    %c0_10 = arith.constant 0 : index
    %c25 = arith.constant 25 : index
    %c0_11 = arith.constant 0 : index
    %9 = vector.load %arg4[%c0_10, %c25, %c0_11] : memref<3x32x16xf32, #tpu.memory_space<vmem>>, vector<3x1x16xf32>
    tpu.vector_store %arg4[%c0_10, %c25, %c0_11], %8 {strides = array<i32>} : memref<3x32x16xf32, #tpu.memory_space<vmem>>, vector<3x1x16xf32>,
    %c0_12 = arith.constant 0 : index
    %c6_13 = arith.constant 6 : index
    %c0_14 = arith.constant 0 : index
    %10 = vector.load %arg4[%c0_12, %c6_13, %c0_14] : memref<3x32x16xf32, #tpu.memory_space<vmem>>, vector<3x16x16xf32>
    %cst = arith.constant 0.0584229901 : f32
    %11 = vector.broadcast %cst : f32 to vector<3x16x16xf32>
    %12 = arith.mulf %11, %10 : vector<3x16x16xf32>
    %c0_15 = arith.constant 0 : index
    %c7_16 = arith.constant 7 : index
    %c0_17 = arith.constant 0 : index
    %13 = vector.load %arg4[%c0_15, %c7_16, %c0_17] : memref<3x32x16xf32, #tpu.memory_space<vmem>>, vector<3x16x16xf32>
    %cst_18 = arith.constant 0.242105275 : f32
    %14 = vector.broadcast %cst_18 : f32 to vector<3x16x16xf32>
    %15 = arith.mulf %14, %13 : vector<3x16x16xf32>
    %16 = arith.addf %12, %15 : vector<3x16x16xf32>
    %c0_19 = arith.constant 0 : index
    %c8_20 = arith.constant 8 : index
    %c0_21 = arith.constant 0 : index
    %17 = vector.load %arg4[%c0_19, %c8_20, %c0_21] : memref<3x32x16xf32, #tpu.memory_space<vmem>>, vector<3x16x16xf32>
    %cst_22 = arith.constant 0.398943484 : f32
    %18 = vector.broadcast %cst_22 : f32 to vector<3x16x16xf32>
    %19 = arith.mulf %18, %17 : vector<3x16x16xf32>
    %20 = arith.addf %16, %19 : vector<3x16x16xf32>
    %c0_23 = arith.constant 0 : index
    %c9 = arith.constant 9 : index
    %c0_24 = arith.constant 0 : index
    %21 = vector.load %arg4[%c0_23, %c9, %c0_24] : memref<3x32x16xf32, #tpu.memory_space<vmem>>, vector<3x16x16xf32>
    %cst_25 = arith.constant 0.242105275 : f32
    %22 = vector.broadcast %cst_25 : f32 to vector<3x16x16xf32>
    %23 = arith.mulf %22, %21 : vector<3x16x16xf32>
    %24 = arith.addf %20, %23 : vector<3x16x16xf32>
    %c0_26 = arith.constant 0 : index
    %c10 = arith.constant 10 : index
    %c0_27 = arith.constant 0 : index
    %25 = vector.load %arg4[%c0_26, %c10, %c0_27] : memref<3x32x16xf32, #tpu.memory_space<vmem>>, vector<3x16x16xf32>
    %cst_28 = arith.constant 0.0584229901 : f32
    %26 = vector.broadcast %cst_28 : f32 to vector<3x16x16xf32>
    %27 = arith.mulf %26, %25 : vector<3x16x16xf32>
    %28 = arith.addf %24, %27 : vector<3x16x16xf32>
    %29 = vector.shape_cast %28 : vector<3x16x16xf32> to vector<48x16xf32>
    %c0_29 = arith.constant 0 : index
    %c0_30 = arith.constant 0 : index
    %30 = vector.load %arg2[%c0_29, %c0_30] : memref<16x16xf32, #tpu.memory_space<vmem>>, vector<16x16xf32>
    %cst_31 = arith.constant dense<0.000000e+00> : vector<48x16xf32>
    %31 = tpu.matmul %29, %30, %cst_31 {dimension_numbers = #tpu.dot_dimension_numbers<[1], [0], [0], [1], [0, 0, 1, 1], [], []>} : vector<48x16xf32>, vector<16x16xf32>, vector<48x16xf32> -> vector<48x16xf32>
    %32 = vector.shape_cast %31 : vector<48x16xf32> to vector<3x16x16xf32>
    %c0_32 = arith.constant 0 : index
    %c0_33 = arith.constant 0 : index
    %c0_34 = arith.constant 0 : index
    %33 = vector.load %arg3[%c0_32, %c0_33, %c0_34] : memref<3x16x16xf32, #tpu.memory_space<vmem>>, vector<3x16x16xf32>
    tpu.vector_store %arg3[%c0_32, %c0_33, %c0_34], %32 {strides = array<i32>} : memref<3x16x16xf32, #tpu.memory_space<vmem>>, vector<3x16x16xf32>,
    return
  }
  func.func @transform_0(%arg0: i32) -> (i32, i32, i32) {
    %c0_i32 = arith.constant 0 : i32
    %c0_i32_0 = arith.constant 0 : i32
    %c0_i32_1 = arith.constant 0 : i32
    return %arg0, %c0_i32, %c0_i32_0 : i32, i32, i32
  }
  func.func @transform_1(%arg0: i32) -> (i32, i32) {
    %c0_i32 = arith.constant 0 : i32
    %c0_i32_0 = arith.constant 0 : i32
    %c0_i32_1 = arith.constant 0 : i32
    return %c0_i32, %c0_i32_0 : i32, i32
  }
  func.func @transform_2(%arg0: i32) -> (i32, i32, i32) {
    %c0_i32 = arith.constant 0 : i32
    %c0_i32_0 = arith.constant 0 : i32
    %c0_i32_1 = arith.constant 0 : i32
    return %arg0, %c0_i32, %c0_i32_0 : i32, i32, i32
  }
}

</mosaic_0001>

<llo_original>
// kernel: tpu_custom_call.1
$region0: #{tpu_custom_call.1}
  #allocation0 [shape = 'u32[]', space=smem, size = 0x4, offset = 0x4, fixed_abs, tag = 'smem constant byte address 0x4 - core index']
  #allocation1 [shape = 'u32[144,128]{1,0:T(1,128)}', space=vmem, size = 0x12000, scoped, tag = 'internal scratch']
  #allocation2 [shape = 'f32[3,32,16]{2,1,0:T(8,128)}', space=vmem, size = 0xc000, scoped, tag = 'scratch operand']
  %s0 = inlined_call_operand.hbm [shape: f32[6,16,16], index: 0, kind: input, shape index: {}]
  %s1 = inlined_call_operand.hbm [shape: f32[16,16], index: 1, kind: input, shape index: {}]
  %s2 = inlined_call_operand.hbm [shape: f32[6,16,16], index: 2, kind: output, shape index: {}]
  %s3 = sld [smem:[#allocation0]]
  $region49: #{tpu_custom_call.1} parent=0
    _
  %s5 = ssub.s32 1, %s3
  %s6 = scalar_select 0, %s5, %s3
  $region1: #{tpu_custom_call.1} parent=0
    #allocation3 [shape = 'u8[49152]{0}', space=vmem, size = 0xc000, scoped, tag = 'input window, operand 0']
    #allocation4 [shape = 's32[2]{0}', space=sflag, size = 0x8, scoped, tag = 'scoped memory for tpu_custom_call.1']
    #allocation5 [shape = 's32[2]{0}', space=sflag, size = 0x8, scoped, tag = 'scoped memory for tpu_custom_call.1']
    #allocation6 [shape = 'u8[8192]{0}', space=vmem, size = 0x2000, scoped, tag = 'input window, operand 1, single buffered']
    #allocation7 [shape = 's32[1]{0}', space=sflag, size = 0x4, scoped, tag = 'scoped memory for tpu_custom_call.1']
    #allocation8 [shape = 'u8[49152]{0}', space=vmem, size = 0xc000, scoped, tag = 'output window, operand 0']
    %7 = vsyncpa [#allocation4], 0
    %s8 = scalar_lea.sflag [#allocation4], 1
    %9 = vsyncpa %s8, 0
    %10 = vsyncpa [#allocation7], 0
    %11 = vsyncpa [#allocation5], 0
    %s12 = scalar_lea.sflag [#allocation5], 1
    %13 = vsyncpa %s12, 0
    loop: start=0, step=1, limit=4
    $region2: #{tpu_custom_call.1} parent=1 // loop_pre_header
      _
    $region3: #{tpu_custom_call.1} parent=1 // loop_header
      %s15 = sphi 0, %s19
      %p16 = scmp.ge.s32.totalorder %s15, 4
      %s25 = sphi 0, %s27
      %s28 = sphi 0, %s25
      %s29 = sphi 0, %s28
      %s45 = sphi 0, %s29
      %s49 = sphi 0, %s49
      %s51 = sphi 0, %s49
      %s52 = sphi 0, %s51
      %s66 = sphi 0, %s52
      %s72 = sphi 0, %s74
      %s75 = sphi 0, %s72
      %s76 = sphi 0, %s75
      %s92 = sphi 0, %s76
    $region4: #{tpu_custom_call.1} parent=1 // loop_header_branch
      %18 = sbr.rel (%p16) target = $region8
    $region5: #{tpu_custom_call.1} parent=1 // loop_body
      %s20 = ssub.s32 %s15, 1
      %s21 = ssub.s32 %s15, 2
      %s22 = sadd.s32 %s15, 1
      %s23 = ssub.s32 %s15, %s22
      %p24 = scmp.eq.s32.totalorder %s23, 0
      %s26 = sadd.s32 %s25, 1
      %s27 = scalar_select %p24, %s25, %s26
      %p30 = pneg %p24
      %p31 = scmp.eq.s32.totalorder %s15, 1
      %p32 = por %p30, %p31
      %p33 = scmp.ne.s32.totalorder %s25, %s28
      %p34 = scmp.eq.s32.totalorder %s15, 0
      %p35 = por %p33, %p34
      %p36 = scmp.ne.s32.totalorder %s25, %s28
      %p37 = scmp.eq.s32.totalorder %s20, 1
      %p38 = por %p36, %p37
      %p39 = scmp.ne.s32.totalorder %s28, %s29
      %p40 = scmp.eq.s32.totalorder %s20, 0
      %p41 = por %p39, %p40
      %p42 = scmp.ne.s32.totalorder %s28, %s29
      %p43 = scmp.eq.s32.totalorder %s21, 1
      %p44 = por %p42, %p43
      %p46 = scmp.ne.s32.totalorder %s29, %s45
      %p47 = scmp.eq.s32.totalorder %s21, 0
      %p48 = por %p46, %p47
      %s50 = sadd.s32 %s49, 1
      %p53 = scmp.eq.s32.totalorder %s15, 1
      %p54 = scmp.ne.s32.totalorder %s49, %s51
      %p55 = scmp.eq.s32.totalorder %s15, 0
      %p56 = por %p54, %p55
      %p57 = scmp.ne.s32.totalorder %s49, %s51
      %p58 = scmp.eq.s32.totalorder %s20, 1
      %p59 = por %p57, %p58
      %p60 = scmp.ne.s32.totalorder %s51, %s52
      %p61 = scmp.eq.s32.totalorder %s20, 0
      %p62 = por %p60, %p61
      %p63 = scmp.ne.s32.totalorder %s51, %s52
      %p64 = scmp.eq.s32.totalorder %s21, 1
      %p65 = por %p63, %p64
      %p67 = scmp.ne.s32.totalorder %s52, %s66
      %p68 = scmp.eq.s32.totalorder %s21, 0
      %p69 = por %p67, %p68
      %s70 = ssub.s32 %s15, %s22
      %p71 = scmp.eq.s32.totalorder %s70, 0
      %s73 = sadd.s32 %s72, 1
      %s74 = scalar_select %p71, %s72, %s73
      %p77 = pneg %p71
      %p78 = scmp.eq.s32.totalorder %s15, 1
      %p79 = por %p77, %p78
      %p80 = scmp.ne.s32.totalorder %s72, %s75
      %p81 = scmp.eq.s32.totalorder %s15, 0
      %p82 = por %p80, %p81
      %p83 = scmp.ne.s32.totalorder %s72, %s75
      %p84 = scmp.eq.s32.totalorder %s20, 1
      %p85 = por %p83, %p84
      %p86 = scmp.ne.s32.totalorder %s75, %s76
      %p87 = scmp.eq.s32.totalorder %s20, 0
      %p88 = por %p86, %p87
      %p89 = scmp.ne.s32.totalorder %s75, %s76
      %p90 = scmp.eq.s32.totalorder %s21, 1
      %p91 = por %p89, %p90
      %p93 = scmp.ne.s32.totalorder %s76, %s92
      %p94 = scmp.eq.s32.totalorder %s21, 0
      %p95 = por %p93, %p94
      %p96 = scmp.le.s32.totalorder 1, %s15
      %p97 = scmp.lt.s32.totalorder %s15, 3
      %p98 = pnand %p96, %p97
      %p99 = pneg %p98
      // Predicated region
      $region9: #{tpu_custom_call.1} parent=5 // pred_check
        _
      $region10: #{tpu_custom_call.1} parent=5 // pred_check_branch
        %101 = sbr.rel (%p98) target = $region12
      $region11: #{tpu_custom_call.1} parent=5 // pred_region
        %s102 = ssub.s32 %s15, 1
        // Predicated region
        $region13: #{tpu_custom_call.1} parent=11 // pred_check
          %p103 = pneg %p62
        $region14: #{tpu_custom_call.1} parent=11 // pred_check_branch
          %105 = sbr.rel (%p103) target = $region16
        $region15: #{tpu_custom_call.1} parent=11 // pred_region
          %s107 = ssub.s32 256, 256
          %108 = vsyncadd [#allocation7], %s107
          %s109 = sshll.u32 [#allocation6], 4
          %s110 = int_to_ptr.vmem [resolvable:$true] %s109
          %115 = dma.hbm_to_vmem [thread:$0]  %s1, 256, %s110, [#allocation7], 128, 128, 8
        $region16: #{tpu_custom_call.1} parent=11 // pred_fallthru
          _
      $region12: #{tpu_custom_call.1} parent=5 // pred_fallthru
        _
      %p116 = scmp.lt.s32.totalorder %s15, 2
      // Predicated region
      $region17: #{tpu_custom_call.1} parent=5 // pred_check
        %p117 = pneg %p116
      $region18: #{tpu_custom_call.1} parent=5 // pred_check_branch
        %119 = sbr.rel (%p117) target = $region20
      $region19: #{tpu_custom_call.1} parent=5 // pred_region
        // Predicated region
        $region21: #{tpu_custom_call.1} parent=19 // pred_check
          %p120 = pneg %p35
        $region22: #{tpu_custom_call.1} parent=19 // pred_check_branch
          %122 = sbr.rel (%p120) target = $region24
        $region23: #{tpu_custom_call.1} parent=19 // pred_region
          %s123 = sand.u32 %s25, 1
          %s124 = scalar_lea.sflag [#allocation4], %s123
          %s125 = sand.u32 %s25, 1
          %s126 = smul.addr %s125, 48
          %s127 = scalar_lea.vmem [#allocation3], %s126
          %s128 = smul.u32 3, %s15
          %s130 = ssub.s32 768, 768
          %131 = vsyncadd %s124, %s130
          %s132 = smul.addr %s128, 2
          %s133 = smul.addr %s132, 128
          %s134 = scalar_lea.hbm %s0, %s133
          %s135 = sshll.u32 %s127, 4
          %s136 = int_to_ptr.vmem [resolvable:$true] %s135
          %141 = dma.hbm_to_vmem [thread:$0]  %s134, 768, %s136, %s124, 128, 128, 8
        $region24: #{tpu_custom_call.1} parent=19 // pred_fallthru
          _
      $region20: #{tpu_custom_call.1} parent=5 // pred_fallthru
        _
      %p142 = scmp.le.s32.totalorder 1, %s15
      %p143 = scmp.lt.s32.totalorder %s15, 3
      %p144 = pnand %p142, %p143
      %p145 = pneg %p144
      // Predicated region
      $region25: #{tpu_custom_call.1} parent=5 // pred_check
        _
      $region26: #{tpu_custom_call.1} parent=5 // pred_check_branch
        %147 = sbr.rel (%p144) target = $region28
      $region27: #{tpu_custom_call.1} parent=5 // pred_region
        %s148 = ssub.s32 %s15, 1
        %s149 = sand.u32 %s28, 1
        %s150 = scalar_lea.sflag [#allocation4], %s149
        %s151 = sand.u32 %s28, 1
        %s152 = smul.addr %s151, 48
        %s153 = scalar_lea.vmem [#allocation3], %s152
        // Predicated region
        $region29: #{tpu_custom_call.1} parent=27 // pred_check
          %p154 = pneg %p41
        $region30: #{tpu_custom_call.1} parent=27 // pred_check_branch
          %156 = sbr.rel (%p154) target = $region32
        $region31: #{tpu_custom_call.1} parent=27 // pred_region
          %157 = dma.done %s150, 768
        $region32: #{tpu_custom_call.1} parent=27 // pred_fallthru
          _
        // Predicated region
        $region33: #{tpu_custom_call.1} parent=27 // pred_check
          %p158 = pneg %p62
        $region34: #{tpu_custom_call.1} parent=27 // pred_check_branch
          %160 = sbr.rel (%p158) target = $region36
        $region35: #{tpu_custom_call.1} parent=27 // pred_region
          %161 = dma.done [#allocation7], 256
        $region36: #{tpu_custom_call.1} parent=27 // pred_fallthru
          _
        %s162 = sand.u32 %s28, 1
        %s163 = scalar_lea.sflag [#allocation4], %s162
        %s164 = sand.u32 %s28, 1
        %s165 = smul.addr %s164, 48
        %s166 = scalar_lea.vmem [#allocation3], %s165
        %p167 = pneg %p41
        %p168 = pneg %p38
        %p169 = pneg %p62
        %p170 = pneg %p59
        %p171 = pneg %p88
        %p172 = pneg %p85
        %s173 = sand.u32 %s75, 1
        %s174 = scalar_lea.sflag [#allocation5], %s173
        %s175 = sand.u32 %s75, 1
        %s176 = smul.addr %s175, 48
        %s177 = scalar_lea.vmem [#allocation8], %s176
        %s178 = smul.u32 3, %s20
        %s179 = smul.u32 3, %s20
        %v180 = vld [vmem:[%s153] sm:$0xff]
        %v181 = vld [vmem:[%s153 + $0x8] sm:$0xff]
        %v182 = vld [vmem:[%s153 + $0x10] sm:$0xff]
        %v183 = vld [vmem:[%s153 + $0x18] sm:$0xff]
        %v184 = vld [vmem:[%s153 + $0x20] sm:$0xff]
        %v185 = vld [vmem:[%s153 + $0x28] sm:$0xff]
        %vm186 = vcmask 130048
        %187 = vst.msk [vmem:[#allocation2 + $0x8] sm:$0xff] %vm186, %v180
        %188 = vst.msk [vmem:[#allocation2 + $0x10] sm:$0xff] %vm186, %v181
        %189 = vst.msk [vmem:[#allocation2 + $0x28] sm:$0xff] %vm186, %v182
        %190 = vst.msk [vmem:[#allocation2 + $0x30] sm:$0xff] %vm186, %v183
        %191 = vst.msk [vmem:[#allocation2 + $0x48] sm:$0xff] %vm186, %v184
        %192 = vst.msk [vmem:[#allocation2 + $0x50] sm:$0xff] %vm186, %v185
        %vm193 = vcmask 124930
        %194 = vst.msk [vmem:[#allocation2 + $0x4] sm:$0x4] %vm193, %v180
        %195 = vst.msk [vmem:[#allocation2 + $0x24] sm:$0x4] %vm193, %v182
        %196 = vst.msk [vmem:[#allocation2 + $0x44] sm:$0x4] %vm193, %v184
        %vm197 = vcmask 129030
        %198 = vst.msk [vmem:[#allocation2 + $0x12] sm:$0x40] %vm197, %v181
        %199 = vst.msk [vmem:[#allocation2 + $0x32] sm:$0x40] %vm197, %v183
        %200 = vst.msk [vmem:[#allocation2 + $0x52] sm:$0x40] %vm197, %v185
        %vm201 = vcmask 123905
        %202 = vst.msk [vmem:[#allocation2 + $0x6] sm:$0x2] %vm201, %v180
        %203 = vst.msk [vmem:[#allocation2 + $0x26] sm:$0x2] %vm201, %v182
        %204 = vst.msk [vmem:[#allocation2 + $0x46] sm:$0x2] %vm201, %v184
        %vm205 = vcmask 128005
        %206 = vst.msk [vmem:[#allocation2 + $0x14] sm:$0x20] %vm205, %v181
        %207 = vst.msk [vmem:[#allocation2 + $0x34] sm:$0x20] %vm205, %v183
        %208 = vst.msk [vmem:[#allocation2 + $0x54] sm:$0x20] %vm205, %v185
        %v209 = vld [vmem:[#allocation2 + $0x6] sm:$0xff]
        %v210 = vld [vmem:[#allocation2 + $0xe] sm:$0xff]
        %v211 = vld [vmem:[#allocation2 + $0x26] sm:$0xff]
        %v212 = vld [vmem:[#allocation2 + $0x2e] sm:$0xff]
        %v213 = vld [vmem:[#allocation2 + $0x46] sm:$0xff]
        %v214 = vld [vmem:[#allocation2 + $0x4e] sm:$0xff]
        %v215 = vmul.f32 %v209, 0.05842299
        %v216 = vmul.f32 %v210, 0.05842299
        %v217 = vmul.f32 %v211, 0.05842299
        %v218 = vmul.f32 %v212, 0.05842299
        %v219 = vmul.f32 %v213, 0.05842299
        %v220 = vmul.f32 %v214, 0.05842299
        %v221 = vld [vmem:[#allocation2 + $0x7] sm:$0xff]
        %v222 = vld [vmem:[#allocation2 + $0xf] sm:$0xff]
        %v223 = vld [vmem:[#allocation2 + $0x27] sm:$0xff]
        %v224 = vld [vmem:[#allocation2 + $0x2f] sm:$0xff]
        %v225 = vld [vmem:[#allocation2 + $0x47] sm:$0xff]
        %v226 = vld [vmem:[#allocation2 + $0x4f] sm:$0xff]
        %v227 = vmul.f32 %v221, 0.24210528
        %v228 = vmul.f32 %v222, 0.24210528
        %v229 = vmul.f32 %v223, 0.24210528
        %v230 = vmul.f32 %v224, 0.24210528
        %v231 = vmul.f32 %v225, 0.24210528
        %v232 = vmul.f32 %v226, 0.24210528
        %v233 = vadd.f32 %v215, %v227
        %v234 = vadd.f32 %v216, %v228
        %v235 = vadd.f32 %v217, %v229
        %v236 = vadd.f32 %v218, %v230
        %v237 = vadd.f32 %v219, %v231
        %v238 = vadd.f32 %v220, %v232
        %v239 = vld [vmem:[#allocation2 + $0x8] sm:$0xff]
        %v240 = vld [vmem:[#allocation2 + $0x10] sm:$0xff]
        %v241 = vld [vmem:[#allocation2 + $0x28] sm:$0xff]
        %v242 = vld [vmem:[#allocation2 + $0x30] sm:$0xff]
        %v243 = vld [vmem:[#allocation2 + $0x48] sm:$0xff]
        %v244 = vld [vmem:[#allocation2 + $0x50] sm:$0xff]
        %v245 = vmul.f32 %v239, 0.39894348
        %v246 = vmul.f32 %v240, 0.39894348
        %v247 = vmul.f32 %v241, 0.39894348
        %v248 = vmul.f32 %v242, 0.39894348
        %v249 = vmul.f32 %v243, 0.39894348
        %v250 = vmul.f32 %v244, 0.39894348
        %v251 = vadd.f32 %v233, %v245
        %v252 = vadd.f32 %v234, %v246
        %v253 = vadd.f32 %v235, %v247
        %v254 = vadd.f32 %v236, %v248
        %v255 = vadd.f32 %v237, %v249
        %v256 = vadd.f32 %v238, %v250
        %v257 = vld [vmem:[#allocation2 + $0x9] sm:$0xff]
        %v258 = vld [vmem:[#allocation2 + $0x11] sm:$0xff]
        %v259 = vld [vmem:[#allocation2 + $0x29] sm:$0xff]
        %v260 = vld [vmem:[#allocation2 + $0x31] sm:$0xff]
        %v261 = vld [vmem:[#allocation2 + $0x49] sm:$0xff]
        %v262 = vld [vmem:[#allocation2 + $0x51] sm:$0xff]
        %v263 = vmul.f32 %v257, 0.24210528
        %v264 = vmul.f32 %v258, 0.24210528
        %v265 = vmul.f32 %v259, 0.24210528
        %v266 = vmul.f32 %v260, 0.24210528
        %v267 = vmul.f32 %v261, 0.24210528
        %v268 = vmul.f32 %v262, 0.24210528
        %v269 = vadd.f32 %v251, %v263
        %v270 = vadd.f32 %v252, %v264
        %v271 = vadd.f32 %v253, %v265
        %v272 = vadd.f32 %v254, %v266
        %v273 = vadd.f32 %v255, %v267
        %v274 = vadd.f32 %v256, %v268
        %v275 = vld [vmem:[#allocation2 + $0xa] sm:$0xff]
        %v276 = vld [vmem:[#allocation2 + $0x12] sm:$0xff]
        %v277 = vld [vmem:[#allocation2 + $0x2a] sm:$0xff]
        %v278 = vld [vmem:[#allocation2 + $0x32] sm:$0xff]
        %v279 = vld [vmem:[#allocation2 + $0x4a] sm:$0xff]
        %v280 = vld [vmem:[#allocation2 + $0x52] sm:$0xff]
        %v281 = vmul.f32 %v275, 0.05842299
        %v282 = vmul.f32 %v276, 0.05842299
        %v283 = vmul.f32 %v277, 0.05842299
        %v284 = vmul.f32 %v278, 0.05842299
        %v285 = vmul.f32 %v279, 0.05842299
        %v286 = vmul.f32 %v280, 0.05842299
        %v287 = vadd.f32 %v269, %v281
        %v288 = vadd.f32 %v270, %v282
        %v289 = vadd.f32 %v271, %v283
        %v290 = vadd.f32 %v272, %v284
        %v291 = vadd.f32 %v273, %v285
        %v292 = vadd.f32 %v274, %v286
        %v293 = vld [vmem:[#allocation6] sm:$0xff]
        %v294 = vld [vmem:[#allocation6 + $0x8] sm:$0xff]
        %v296 = vsel %vm186, %v287, 0
        %v299 = vsel %vm186, %v288, 0
        %v302 = vsel %vm186, %v289, 0
        %v305 = vsel %vm186, %v290, 0
        %v308 = vsel %vm186, %v291, 0
        %v311 = vsel %vm186, %v292, 0
        %313 = vmatprep.subr.mxu0 0.0
        %314 = vmatpush1.msra.mxu0 0.0
        %315 = vmatprep.subr.mxu0 0.0
        %316 = vmatpush1.msra.mxu0 0.0
        %317 = vmatprep.subr.mxu0 0.0
        %318 = vmatpush1.msra.mxu0 0.0
        %319 = vmatprep.subr.mxu0 0.0
        %320 = vmatpush1.msra.mxu0 0.0
        %321 = vmatprep.subr.mxu0 0.0
        %322 = vmatpush1.msra.mxu0 0.0
        %323 = vmatprep.subr.mxu0 0.0
        %324 = vmatpush1.msra.mxu0 0.0
        %325 = vmatprep.subr.mxu0 0.0
        %326 = vmatpush1.msra.mxu0 0.0
        %327 = vmatprep.subr.mxu0 0.0
        %328 = vmatpush1.msra.mxu0 0.0
        %329 = vmatprep.subr.mxu0 0.0
        %330 = vmatpush1.msra.mxu0 0.0
        %331 = vmatprep.subr.mxu0 0.0
        %332 = vmatpush1.msra.mxu0 0.0
        %333 = vmatprep.subr.mxu0 0.0
        %334 = vmatpush1.msra.mxu0 0.0
        %335 = vmatprep.subr.mxu0 0.0
        %336 = vmatpush1.msra.mxu0 0.0
        %337 = vmatprep.subr.mxu0 0.0
        %338 = vmatpush1.msra.mxu0 0.0
        %339 = vmatprep.subr.mxu0 0.0
        %340 = vmatpush1.msra.mxu0 0.0
        %341 = vmatprep.subr.mxu0 0.0
        %342 = vmatpush1.msra.mxu0 %v294
        %343 = vmatprep.subr.mxu0 0.0
        %344 = vmatpush1.msra.mxu0 %v293
        %345 = vmatprep.subr.mxu0 0.0
        %346 = vmatpush2.msra.mxu0 0.0
        %347 = vmatprep.subr.mxu0 0.0
        %348 = vmatpush2.msra.mxu0 0.0
        %349 = vmatprep.subr.mxu0 0.0
        %350 = vmatpush2.msra.mxu0 0.0
        %351 = vmatprep.subr.mxu0 0.0
        %352 = vmatpush2.msra.mxu0 0.0
        %353 = vmatprep.subr.mxu0 0.0
        %354 = vmatpush2.msra.mxu0 0.0
        %355 = vmatprep.subr.mxu0 0.0
        %356 = vmatpush2.msra.mxu0 0.0
        %357 = vmatprep.subr.mxu0 0.0
        %358 = vmatpush2.msra.mxu0 0.0
        %359 = vmatprep.subr.mxu0 0.0
        %360 = vmatpush2.msra.mxu0 0.0
        %361 = vmatprep.subr.mxu0 0.0
        %362 = vmatpush2.msra.mxu0 0.0
        %363 = vmatprep.subr.mxu0 0.0
        %364 = vmatpush2.msra.mxu0 0.0
        %365 = vmatprep.subr.mxu0 0.0
        %366 = vmatpush2.msra.mxu0 0.0
        %367 = vmatprep.subr.mxu0 0.0
        %368 = vmatpush2.msra.mxu0 0.0
        %369 = vmatprep.subr.mxu0 0.0
        %370 = vmatpush2.msra.mxu0 0.0
        %371 = vmatprep.subr.mxu0 0.0
        %372 = vmatpush2.msra.mxu0 0.0
        %373 = vmatprep.subr.mxu0 0.0
        %374 = vmatpush2.msra.mxu0 0.0
        %375 = vmatprep.subr.mxu0 0.0
        %376 = vmatpush2.msra.mxu0 0.0
        %377 = vmatprep.mubr.f32.mxu0 0.0
        %378 = vmatmul.mubr.f32.gmra.mxu0 %v296
        %v379 = vpop.f32.mrf.mxu0
        %v380 = vadd.f32 0.0, %v379
        %v381 = vpop.f32.mrf.mxu0
        %382 = vmatprep.mubr.f32.mxu0 0.0
        %383 = vmatmul.mubr.f32.gmra.mxu0 %v299
        %v384 = vpop.f32.mrf.mxu0
        %v385 = vadd.f32 0.0, %v384
        %v386 = vpop.f32.mrf.mxu0
        %387 = vmatprep.mubr.f32.mxu0 0.0
        %388 = vmatmul.mubr.f32.gmra.mxu0 %v302
        %v389 = vpop.f32.mrf.mxu0
        %v390 = vadd.f32 0.0, %v389
        %v391 = vpop.f32.mrf.mxu0
        %392 = vmatprep.mubr.f32.mxu0 0.0
        %393 = vmatmul.mubr.f32.gmra.mxu0 %v305
        %v394 = vpop.f32.mrf.mxu0
        %v395 = vadd.f32 0.0, %v394
        %v396 = vpop.f32.mrf.mxu0
        %397 = vmatprep.mubr.f32.mxu0 0.0
        %398 = vmatmul.mubr.f32.gmra.mxu0 %v308
        %v399 = vpop.f32.mrf.mxu0
        %v400 = vadd.f32 0.0, %v399
        %v401 = vpop.f32.mrf.mxu0
        %402 = vmatprep.mubr.f32.mxu0 0.0
        %403 = vmatmul.mubr.f32.gmra.mxu0 %v311
        %v404 = vpop.f32.mrf.mxu0
        %v405 = vadd.f32 0.0, %v404
        %v406 = vpop.f32.mrf.mxu0
        %407 = vdwg.mxu0
        %408 = vst.msk [vmem:[%s177] sm:$0xff] %vm186, %v380
        %409 = vst.msk [vmem:[%s177 + $0x8] sm:$0xff] %vm186, %v385
        %410 = vst.msk [vmem:[%s177 + $0x10] sm:$0xff] %vm186, %v390
        %411 = vst.msk [vmem:[%s177 + $0x18] sm:$0xff] %vm186, %v395
        %412 = vst.msk [vmem:[%s177 + $0x20] sm:$0xff] %vm186, %v400
        %413 = vst.msk [vmem:[%s177 + $0x28] sm:$0xff] %vm186, %v405
        %s414 = sand.u32 %s75, 1
        %s415 = scalar_lea.sflag [#allocation5], %s414
        %s416 = sand.u32 %s75, 1
        %s417 = smul.addr %s416, 48
        %s418 = scalar_lea.vmem [#allocation8], %s417
        // Predicated region
        $region37: #{tpu_custom_call.1} parent=27 // pred_check
          %p419 = pneg %p85
        $region38: #{tpu_custom_call.1} parent=27 // pred_check_branch
          %421 = sbr.rel (%p419) target = $region40
        $region39: #{tpu_custom_call.1} parent=27 // pred_region
          %s422 = smul.u32 3, %s20
          %s424 = ssub.s32 768, 768
          %425 = vsyncadd %s415, %s424
          %s426 = smul.addr %s422, 2
          %s427 = smul.addr %s426, 128
          %s428 = scalar_lea.hbm %s2, %s427
          %s429 = sshll.u32 %s418, 4
          %s430 = int_to_ptr.vmem [resolvable:$true] %s429
          %435 = dma.vmem_to_hbm [thread:$0]  %s430, 768, %s428, %s415, 128, 128, 8
        $region40: #{tpu_custom_call.1} parent=27 // pred_fallthru
          _
      $region28: #{tpu_custom_call.1} parent=5 // pred_fallthru
        _
      %p436 = scmp.le.s32.totalorder 2, %s15
      // Predicated region
      $region41: #{tpu_custom_call.1} parent=5 // pred_check
        %p437 = pneg %p436
      $region42: #{tpu_custom_call.1} parent=5 // pred_check_branch
        %439 = sbr.rel (%p437) target = $region44
      $region43: #{tpu_custom_call.1} parent=5 // pred_region
        %s440 = ssub.s32 %s15, 2
        // Predicated region
        $region45: #{tpu_custom_call.1} parent=43 // pred_check
          %p441 = pneg %p91
        $region46: #{tpu_custom_call.1} parent=43 // pred_check_branch
          %443 = sbr.rel (%p441) target = $region48
        $region47: #{tpu_custom_call.1} parent=43 // pred_region
          %s444 = sand.u32 %s76, 1
          %s445 = scalar_lea.sflag [#allocation5], %s444
          %s446 = sand.u32 %s76, 1
          %s447 = smul.addr %s446, 48
          %s448 = scalar_lea.vmem [#allocation8], %s447
          %449 = dma.done %s445, 768
        $region48: #{tpu_custom_call.1} parent=43 // pred_fallthru
          _
      $region44: #{tpu_custom_call.1} parent=5 // pred_fallthru
        _
    $region6: #{tpu_custom_call.1} parent=1 // loop_footer
      %s19 = sadd.s32 1, %s15
    $region7: #{tpu_custom_call.1} parent=1 // loop_footer_branch
      %14 = sbr.rel target = $region3
    $region8: #{tpu_custom_call.1} parent=1 // loop_exit
      _
    %450 = vsyncpa [#allocation4], 1
    %s451 = scalar_lea.sflag [#allocation4], 1
    %452 = vsyncpa %s451, 1
    %453 = vsyncpa [#allocation7], 1
    %454 = vsyncpa [#allocation5], 1
    %s455 = scalar_lea.sflag [#allocation5], 1
    %456 = vsyncpa %s455, 1

</llo_original>
